<compile_context>
chip_gen: v7x
topology: tpu7x:2x2x1
jax: 0.10.0
libtpu: 0.0.40
codegen_flags: <defaults>
</compile_context>

<pallas_src>
import jax
import jax.numpy as jnp
from jax.experimental import pallas as pl
from jax.experimental.pallas import tpu as pltpu

LN_EPS = 1e-5      # torch.nn.LayerNorm default
LANES = 128
_VEC_ROWS = 16     # rows in the f32 bias / LN / mask operand


def _round_up(x, m):
    return ((x + m - 1) // m) * m


# ---------------------------------------------------------------------------
# Kernel
# ---------------------------------------------------------------------------
def _make_dqn_kernel(nobs_p, n_actions, bf16_dots):
    inv_act = 1.0 / float(n_actions)

    def dot(a, w):
        # Weights are already in their storage dtype (bf16 on the perf path,
        # f32 on the exactness path); only activations get cast here.
        if bf16_dots:
            a = a.astype(jnp.bfloat16)
        return jnp.dot(a, w, preferred_element_type=jnp.float32)

    def kernel(x_ref, w1_ref, wbig_ref, vec_ref, out_ref):
        x = x_ref[...].astype(jnp.float32)                  # (TB, nobs_p)

        def row(i):
            return vec_ref[i:i + 1, :]                      # (1, 128), f32

        def lin_ln_relu(h, w, b_i, g_i, be_i, n_feat):
            h = dot(h, w) + row(b_i)                        # padded lanes stay exactly 0
            inv_n = 1.0 / float(n_feat)
            mu = jnp.sum(h, axis=-1, keepdims=True) * inv_n
            ex2 = jnp.sum(h * h, axis=-1, keepdims=True) * inv_n
            var = jnp.maximum(ex2 - mu * mu, 0.0)           # single-pass; clamped
            hn = (h - mu) * jax.lax.rsqrt(var + LN_EPS)
            hn = hn * row(g_i) + row(be_i)                  # gamma=beta=0 on padded lanes -> 0
            return jnp.maximum(hn, 0.0)

        # feature_layer: Linear(n_obs,64)+LN+ReLU, Linear(64,32)+LN+ReLU, Linear(32,16)+LN+ReLU
        h = lin_ln_relu(x, w1_ref[...], 0, 1, 2, 64)
        h = lin_ln_relu(h, wbig_ref[0], 3, 4, 5, 32)
        feats = lin_ln_relu(h, wbig_ref[1], 6, 7, 8, 16)

        # fused heads: one dot -> [adv_hidden(8) | val_hidden(8) | 0...],
        # one block-diagonal dot -> [advantage(n_actions) | value | 0...]
        hid = jnp.maximum(dot(feats, wbig_ref[2]) + row(9), 0.0)
        head = dot(hid, wbig_ref[3]) + row(10)

        v = head[:, n_actions:n_actions + 1]                            # (TB, 1)
        # head lanes > n_actions are exactly 0, so sum(head) = sum(adv) + v.
        total = jnp.sum(head, axis=-1, keepdims=True)
        a_mean = (total - v) * inv_act
        # lanes 0..n_actions-1 hold q = v + a - mean(a); mask row zeroes the rest
        # so the padded buffer is safe to return directly (lane-dense store).
        q = (head + v - a_mean) * row(11)
        out_ref[...] = q.astype(out_ref.dtype)

    return kernel


# ---------------------------------------------------------------------------
# Parameter packing (done once, outside the kernel)
# ---------------------------------------------------------------------------
def pack_params(p, n_observations, n_actions, weight_dtype=jnp.bfloat16):
    """Returns (w1, wbig, vec):
         w1   : (nobs_p, 128)      weight_dtype
         wbig : (4, 128, 128)      weight_dtype  [w2, w3, fused head hidden, fused head out]
         vec  : (16, 128)          f32           biases / LN params / head biases / mask
    """
    assert n_actions + 1 <= LANES, "n_actions+1 must fit in the 128-lane head tile"
    nobs_p = _round_up(n_observations, 16)

    def pad2(w, rows):
        out = jnp.zeros((rows, LANES), jnp.float32)
        return out.at[:w.shape[0], :w.shape[1]].set(w.astype(jnp.float32))

    w1 = pad2(p["w1"], nobs_p)
    w2 = pad2(p["w2"], LANES)
    w3 = pad2(p["w3"], LANES)

    # fused head-hidden weight: cols 0..7 = advantage hidden, cols 8..15 = value hidden
    wh = jnp.zeros((LANES, LANES), jnp.float32)
    wh = wh.at[:16, 0:8].set(p["wa1"]).at[:16, 8:16].set(p["wv1"])

    # fused head-out weight (block diagonal): adv hidden -> lanes 0..n_actions-1,
    # value hidden -> lane n_actions
    wo = jnp.zeros((LANES, LANES), jnp.float32)
    wo = wo.at[0:8, 0:n_actions].set(p["wa2"])
    wo = wo.at[8:16, n_actions:n_actions + 1].set(p["wv2"])

    def padrow(v):
        r = jnp.zeros((1, LANES), jnp.float32)
        return r.at[:, :v.shape[-1]].set(v.reshape(1, -1).astype(jnp.float32))

    bh = jnp.zeros((1, LANES), jnp.float32)
    bh = bh.at[:, 0:8].set(p["ba1"].reshape(1, 8)).at[:, 8:16].set(p["bv1"].reshape(1, 8))
    bo = jnp.zeros((1, LANES), jnp.float32)
    bo = bo.at[:, 0:n_actions].set(p["ba2"].reshape(1, -1))
    bo = bo.at[:, n_actions:n_actions + 1].set(p["bv2"].reshape(1, 1))
    mask = jnp.zeros((1, LANES), jnp.float32).at[:, :n_actions].set(1.0)

    vec = jnp.concatenate(
        [
            padrow(p["b1"]), padrow(p["g1"]), padrow(p["be1"]),
            padrow(p["b2"]), padrow(p["g2"]), padrow(p["be2"]),
            padrow(p["b3"]), padrow(p["g3"]), padrow(p["be3"]),
            bh, bo, mask,
            jnp.zeros((_VEC_ROWS - 12, LANES), jnp.float32),
        ],
        axis=0,
    )                                                        # (16, 128) f32

    wbig = jnp.stack([w2, w3, wh, wo], axis=0).astype(weight_dtype)
    return w1.astype(weight_dtype), wbig, vec


# ---------------------------------------------------------------------------
# Wrapper
# ---------------------------------------------------------------------------
def dqn_forward(x, w1, wbig, vec, n_actions, *, block_batch=None,
                out_dtype=jnp.bfloat16):
    """x: (B, n_observations) float32; w1/wbig/vec from pack_params.

    Returns the padded, lane-dense (b_pad, 128) Q-value buffer:
      - rows  >= B          are batch padding,
      - lanes >= n_actions  are exactly 0 (masked in-kernel).
    Index out[:B, :n_actions] (or fuse the consumer) downstream; the wrapper
    deliberately does NOT slice, to avoid a second full HBM pass over the output.
    """
    B, n_obs = x.shape
    nobs_p = w1.shape[0]
    bf16_dots = (wbig.dtype == jnp.bfloat16)

    # lane-pad features to the packed width
    if n_obs < nobs_p:
        x = jnp.pad(x, ((0, 0), (0, nobs_p - n_obs)))

    # Batch tile: multiple of 8 sublanes, capped at 256 rows so large batches
    # give a grid with many steps.  That is what enables the software pipeline
    # (input prefetch + output writeback overlapped with compute) and lets
    # dimension_semantics=("parallel",) shard rows across v7x's two TensorCores.
    # VMEM is not the constraint (per-step footprint is far below 64 MiB).
    if block_batch is None:
        block_batch = min(256, max(8, _round_up(pl.cdiv(B, 8), 8)))
    block_batch = _round_up(block_batch, 8)
    b_pad = _round_up(B, block_batch)
    if b_pad != B:
        x = jnp.pad(x, ((0, b_pad - B), (0, 0)))

    grid = (b_pad // block_batch,)
    kernel = _make_dqn_kernel(nobs_p, n_actions, bf16_dots)

    out = pl.pallas_call(
        kernel,
        out_shape=jax.ShapeDtypeStruct((b_pad, LANES), out_dtype),
        grid_spec=pltpu.PrefetchScalarGridSpec(
            num_scalar_prefetch=0,
            grid=grid,
            in_specs=[
                pl.BlockSpec((block_batch, nobs_p), lambda i: (i, 0)),
                pl.BlockSpec((nobs_p, LANES), lambda i: (0, 0)),
                pl.BlockSpec((4, LANES, LANES), lambda i: (0, 0, 0)),
                pl.BlockSpec((_VEC_ROWS, LANES), lambda i: (0, 0)),
            ],
            out_specs=pl.BlockSpec((block_batch, LANES), lambda i: (i, 0)),
        ),
        compiler_params=pltpu.CompilerParams(
            dimension_semantics=("parallel",)),
    )(x, w1, wbig, vec)

    return out


# ---------------------------------------------------------------------------
# Init (PyTorch-default-like) and pure-JAX reference
# ---------------------------------------------------------------------------
def init_params(key, n_observations, n_actions):
    def linear_init(key, fan_in, fan_out):
        kw, kb = jax.random.split(key)
        bound = 1.0 / jnp.sqrt(jnp.float32(fan_in))
        w = jax.random.uniform(kw, (fan_in, fan_out), jnp.float32, -bound, bound)
        b = jax.random.uniform(kb, (1, fan_out), jnp.float32, -bound, bound)
        return w, b

    keys = jax.random.split(key, 7)
    p = {}
    p["w1"], p["b1"] = linear_init(keys[0], n_observations, 64)
    p["g1"], p["be1"] = jnp.ones((1, 64), jnp.float32), jnp.zeros((1, 64), jnp.float32)
    p["w2"], p["b2"] = linear_init(keys[1], 64, 32)
    p["g2"], p["be2"] = jnp.ones((1, 32), jnp.float32), jnp.zeros((1, 32), jnp.float32)
    p["w3"], p["b3"] = linear_init(keys[2], 32, 16)
    p["g3"], p["be3"] = jnp.ones((1, 16), jnp.float32), jnp.zeros((1, 16), jnp.float32)
    p["wv1"], p["bv1"] = linear_init(keys[3], 16, 8)
    p["wv2"], p["bv2"] = linear_init(keys[4], 8, 1)
    p["wa1"], p["ba1"] = linear_init(keys[5], 16, 8)
    p["wa2"], p["ba2"] = linear_init(keys[6], 8, n_actions)
    return p


def dqn_reference(x, p):
    def ln(h, g, b):
        mu = jnp.mean(h, axis=-1, keepdims=True)
        var = jnp.mean((h - mu) ** 2, axis=-1, keepdims=True)
        return (h - mu) / jnp.sqrt(var + LN_EPS) * g + b

    h = jax.nn.relu(ln(x @ p["w1"] + p["b1"], p["g1"], p["be1"]))
    h = jax.nn.relu(ln(h @ p["w2"] + p["b2"], p["g2"], p["be2"]))
    f = jax.nn.relu(ln(h @ p["w3"] + p["b3"], p["g3"], p["be3"]))
    v = jax.nn.relu(f @ p["wv1"] + p["bv1"]) @ p["wv2"] + p["bv2"]
    a = jax.nn.relu(f @ p["wa1"] + p["ba1"]) @ p["wa2"] + p["ba2"]
    return v + a - jnp.mean(a, axis=1, keepdims=True)


if __name__ == "__main__":
    n_observations = 32
    n_actions = 6
    batch = 8

    key = jax.random.PRNGKey(0)
    k_x, k_p = jax.random.split(key)
    x = jax.random.normal(k_x, (batch, n_observations), jnp.float32)
    params = init_params(k_p, n_observations, n_actions)
    q_ref = dqn_reference(x, params)

    # (1) f32 weights + f32 output: proves packing / head fusion / LN rewrite are exact.
    w1f, wbigf, vecf = pack_params(params, n_observations, n_actions,
                                   weight_dtype=jnp.float32)
    out_f32 = dqn_forward(x, w1f, wbigf, vecf, n_actions, out_dtype=jnp.float32)
    jax.block_until_ready(out_f32)
    q_f32 = out_f32[:batch, :n_actions]
    assert q_f32.shape == (batch, n_actions)
    assert jnp.allclose(q_f32, q_ref, atol=1e-4, rtol=1e-4), "f32 mismatch vs reference"
    assert jnp.allclose(out_f32[:batch, n_actions:], 0.0), "pad lanes not zeroed"

    # (2) perf path: pre-cast bf16 weights + bf16 output (f32 accumulation inside).
    w1b, wbigb, vecb = pack_params(params, n_observations, n_actions,
                                   weight_dtype=jnp.bfloat16)
    out_bf16 = dqn_forward(x, w1b, wbigb, vecb, n_actions, out_dtype=jnp.bfloat16)
    jax.block_until_ready(out_bf16)
    q_bf16 = out_bf16[:batch, :n_actions].astype(jnp.float32)
    assert q_bf16.shape == (batch, n_actions)
    assert jnp.allclose(q_bf16, q_ref, atol=1e-1, rtol=1e-1), "bf16 mismatch vs reference"

    # (3) non-multiple-of-8 batch (action-selection style) exercises the padding path.
    x5 = jax.random.normal(jax.random.PRNGKey(1), (5, n_observations), jnp.float32)
    out5 = dqn_forward(x5, w1f, wbigf, vecf, n_actions, out_dtype=jnp.float32)
    jax.block_until_ready(out5)
    assert jnp.allclose(out5[:5, :n_actions], dqn_reference(x5, params),
                        atol=1e-4, rtol=1e-4), "padded-batch mismatch"

    # (4) larger batch -> multi-step grid (pipelined, v7x-shardable); exact f32 check.
    xl = jax.random.normal(jax.random.PRNGKey(2), (600, n_observations), jnp.float32)
    outl = dqn_forward(xl, w1f, wbigf, vecf, n_actions, out_dtype=jnp.float32)
    jax.block_until_ready(outl)
    assert jnp.allclose(outl[:600, :n_actions], dqn_reference(xl, params),
                        atol=1e-4, rtol=1e-4), "multi-tile grid mismatch"

    print("KERNEL_OK")
</pallas_src>

<mosaic_0001>
module attributes {stable_mosaic.version = 11 : i64} {
  func.func @kernel(%arg0: i32, %arg1: memref<8x32xf32, #tpu.memory_space<vmem>>, %arg2: memref<32x128xf32, #tpu.memory_space<vmem>>, %arg3: memref<4x128x128xf32, #tpu.memory_space<vmem>>, %arg4: memref<16x128xf32, #tpu.memory_space<vmem>>, %arg5: memref<8x128xf32, #tpu.memory_space<vmem>>) attributes {dimension_semantics = [#tpu.dimension_semantics<parallel>], iteration_bounds = array<i64: 1>, scalar_prefetch = 0 : i64, scratch_operands = 0 : i64, tpu.core_type = #tpu.core_type<tc>, window_params = [{transform_indices = @transform_0, window_bounds = array<i64: 8, 32>}, {pipeline_mode = #tpu.pipeline_mode<synchronous>, transform_indices = @transform_1, window_bounds = array<i64: 32, 128>}, {pipeline_mode = #tpu.pipeline_mode<synchronous>, transform_indices = @transform_2, window_bounds = array<i64: 4, 128, 128>}, {pipeline_mode = #tpu.pipeline_mode<synchronous>, transform_indices = @transform_3, window_bounds = array<i64: 16, 128>}, {transform_indices = @transform_4, window_bounds = array<i64: 8, 128>}]} {
    %c0 = arith.constant 0 : index
    %c0_0 = arith.constant 0 : index
    %0 = vector.load %arg1[%c0, %c0_0] : memref<8x32xf32, #tpu.memory_space<vmem>>, vector<8x32xf32>
    %c0_1 = arith.constant 0 : index
    %c0_2 = arith.constant 0 : index
    %1 = vector.load %arg2[%c0_1, %c0_2] : memref<32x128xf32, #tpu.memory_space<vmem>>, vector<32x128xf32>
    %cst = arith.constant dense<0.000000e+00> : vector<8x128xf32>
    %2 = tpu.matmul %0, %1, %cst {dimension_numbers = #tpu.dot_dimension_numbers<[1], [0], [0], [1], [0, 0, 1, 1], [], []>} : vector<8x32xf32>, vector<32x128xf32>, vector<8x128xf32> -> vector<8x128xf32>
    %c0_3 = arith.constant 0 : index
    %c0_4 = arith.constant 0 : index
    %3 = vector.load %arg4[%c0_3, %c0_4] : memref<16x128xf32, #tpu.memory_space<vmem>>, vector<1x128xf32>
    %4 = vector.broadcast %3 : vector<1x128xf32> to vector<8x128xf32>
    %5 = arith.addf %2, %4 : vector<8x128xf32>
    %cst_5 = arith.constant dense<0.000000e+00> : vector<8xf32>
    %6 = vector.multi_reduction <add>, %5, %cst_5 [1] : vector<8x128xf32> to vector<8xf32>
    %7 = vector.shape_cast %6 : vector<8xf32> to vector<8x1xf32>
    %cst_6 = arith.constant 1.562500e-02 : f32
    %8 = vector.broadcast %cst_6 : f32 to vector<8x1xf32>
    %9 = arith.mulf %7, %8 : vector<8x1xf32>
    %10 = arith.mulf %5, %5 : vector<8x128xf32>
    %cst_7 = arith.constant dense<0.000000e+00> : vector<8xf32>
    %11 = vector.multi_reduction <add>, %10, %cst_7 [1] : vector<8x128xf32> to vector<8xf32>
    %12 = vector.shape_cast %11 : vector<8xf32> to vector<8x1xf32>
    %cst_8 = arith.constant 1.562500e-02 : f32
    %13 = vector.broadcast %cst_8 : f32 to vector<8x1xf32>
    %14 = arith.mulf %12, %13 : vector<8x1xf32>
    %15 = arith.mulf %9, %9 : vector<8x1xf32>
    %16 = arith.subf %14, %15 : vector<8x1xf32>
    %cst_9 = arith.constant 0.000000e+00 : f32
    %17 = vector.broadcast %cst_9 : f32 to vector<8x1xf32>
    %18 = arith.maximumf %16, %17 : vector<8x1xf32>
    %19 = vector.broadcast %9 : vector<8x1xf32> to vector<8x128xf32>
    %20 = arith.subf %5, %19 : vector<8x128xf32>
    %cst_10 = arith.constant 9.99999974E-6 : f32
    %21 = vector.broadcast %cst_10 : f32 to vector<8x1xf32>
    %22 = arith.addf %18, %21 : vector<8x1xf32>
    %23 = math.rsqrt %22 : vector<8x1xf32>
    %24 = vector.broadcast %23 : vector<8x1xf32> to vector<8x128xf32>
    %25 = arith.mulf %20, %24 : vector<8x128xf32>
    %c1 = arith.constant 1 : index
    %c0_11 = arith.constant 0 : index
    %26 = vector.load %arg4[%c1, %c0_11] : memref<16x128xf32, #tpu.memory_space<vmem>>, vector<1x128xf32>
    %27 = vector.broadcast %26 : vector<1x128xf32> to vector<8x128xf32>
    %28 = arith.mulf %25, %27 : vector<8x128xf32>
    %c2 = arith.constant 2 : index
    %c0_12 = arith.constant 0 : index
    %29 = vector.load %arg4[%c2, %c0_12] : memref<16x128xf32, #tpu.memory_space<vmem>>, vector<1x128xf32>
    %30 = vector.broadcast %29 : vector<1x128xf32> to vector<8x128xf32>
    %31 = arith.addf %28, %30 : vector<8x128xf32>
    %cst_13 = arith.constant 0.000000e+00 : f32
    %32 = vector.broadcast %cst_13 : f32 to vector<8x128xf32>
    %33 = arith.maximumf %31, %32 : vector<8x128xf32>
    %c0_14 = arith.constant 0 : index
    %c0_15 = arith.constant 0 : index
    %c0_16 = arith.constant 0 : index
    %34 = vector.load %arg3[%c0_14, %c0_15, %c0_16] : memref<4x128x128xf32, #tpu.memory_space<vmem>>, vector<1x128x128xf32>
    %35 = vector.shape_cast %34 : vector<1x128x128xf32> to vector<128x128xf32>
    %cst_17 = arith.constant dense<0.000000e+00> : vector<8x128xf32>
    %36 = tpu.matmul %33, %35, %cst_17 {dimension_numbers = #tpu.dot_dimension_numbers<[1], [0], [0], [1], [0, 0, 1, 1], [], []>} : vector<8x128xf32>, vector<128x128xf32>, vector<8x128xf32> -> vector<8x128xf32>
    %c3 = arith.constant 3 : index
    %c0_18 = arith.constant 0 : index
    %37 = vector.load %arg4[%c3, %c0_18] : memref<16x128xf32, #tpu.memory_space<vmem>>, vector<1x128xf32>
    %38 = vector.broadcast %37 : vector<1x128xf32> to vector<8x128xf32>
    %39 = arith.addf %36, %38 : vector<8x128xf32>
    %cst_19 = arith.constant dense<0.000000e+00> : vector<8xf32>
    %40 = vector.multi_reduction <add>, %39, %cst_19 [1] : vector<8x128xf32> to vector<8xf32>
    %41 = vector.shape_cast %40 : vector<8xf32> to vector<8x1xf32>
    %cst_20 = arith.constant 3.125000e-02 : f32
    %42 = vector.broadcast %cst_20 : f32 to vector<8x1xf32>
    %43 = arith.mulf %41, %42 : vector<8x1xf32>
    %44 = arith.mulf %39, %39 : vector<8x128xf32>
    %cst_21 = arith.constant dense<0.000000e+00> : vector<8xf32>
    %45 = vector.multi_reduction <add>, %44, %cst_21 [1] : vector<8x128xf32> to vector<8xf32>
    %46 = vector.shape_cast %45 : vector<8xf32> to vector<8x1xf32>
    %cst_22 = arith.constant 3.125000e-02 : f32
    %47 = vector.broadcast %cst_22 : f32 to vector<8x1xf32>
    %48 = arith.mulf %46, %47 : vector<8x1xf32>
    %49 = arith.mulf %43, %43 : vector<8x1xf32>
    %50 = arith.subf %48, %49 : vector<8x1xf32>
    %cst_23 = arith.constant 0.000000e+00 : f32
    %51 = vector.broadcast %cst_23 : f32 to vector<8x1xf32>
    %52 = arith.maximumf %50, %51 : vector<8x1xf32>
    %53 = vector.broadcast %43 : vector<8x1xf32> to vector<8x128xf32>
    %54 = arith.subf %39, %53 : vector<8x128xf32>
    %cst_24 = arith.constant 9.99999974E-6 : f32
    %55 = vector.broadcast %cst_24 : f32 to vector<8x1xf32>
    %56 = arith.addf %52, %55 : vector<8x1xf32>
    %57 = math.rsqrt %56 : vector<8x1xf32>
    %58 = vector.broadcast %57 : vector<8x1xf32> to vector<8x128xf32>
    %59 = arith.mulf %54, %58 : vector<8x128xf32>
    %c4 = arith.constant 4 : index
    %c0_25 = arith.constant 0 : index
    %60 = vector.load %arg4[%c4, %c0_25] : memref<16x128xf32, #tpu.memory_space<vmem>>, vector<1x128xf32>
    %61 = vector.broadcast %60 : vector<1x128xf32> to vector<8x128xf32>
    %62 = arith.mulf %59, %61 : vector<8x128xf32>
    %c5 = arith.constant 5 : index
    %c0_26 = arith.constant 0 : index
    %63 = vector.load %arg4[%c5, %c0_26] : memref<16x128xf32, #tpu.memory_space<vmem>>, vector<1x128xf32>
    %64 = vector.broadcast %63 : vector<1x128xf32> to vector<8x128xf32>
    %65 = arith.addf %62, %64 : vector<8x128xf32>
    %cst_27 = arith.constant 0.000000e+00 : f32
    %66 = vector.broadcast %cst_27 : f32 to vector<8x128xf32>
    %67 = arith.maximumf %65, %66 : vector<8x128xf32>
    %c1_28 = arith.constant 1 : index
    %c0_29 = arith.constant 0 : index
    %c0_30 = arith.constant 0 : index
    %68 = vector.load %arg3[%c1_28, %c0_29, %c0_30] : memref<4x128x128xf32, #tpu.memory_space<vmem>>, vector<1x128x128xf32>
    %69 = vector.shape_cast %68 : vector<1x128x128xf32> to vector<128x128xf32>
    %cst_31 = arith.constant dense<0.000000e+00> : vector<8x128xf32>
    %70 = tpu.matmul %67, %69, %cst_31 {dimension_numbers = #tpu.dot_dimension_numbers<[1], [0], [0], [1], [0, 0, 1, 1], [], []>} : vector<8x128xf32>, vector<128x128xf32>, vector<8x128xf32> -> vector<8x128xf32>
    %c6 = arith.constant 6 : index
    %c0_32 = arith.constant 0 : index
    %71 = vector.load %arg4[%c6, %c0_32] : memref<16x128xf32, #tpu.memory_space<vmem>>, vector<1x128xf32>
    %72 = vector.broadcast %71 : vector<1x128xf32> to vector<8x128xf32>
    %73 = arith.addf %70, %72 : vector<8x128xf32>
    %cst_33 = arith.constant dense<0.000000e+00> : vector<8xf32>
    %74 = vector.multi_reduction <add>, %73, %cst_33 [1] : vector<8x128xf32> to vector<8xf32>
    %75 = vector.shape_cast %74 : vector<8xf32> to vector<8x1xf32>
    %cst_34 = arith.constant 6.250000e-02 : f32
    %76 = vector.broadcast %cst_34 : f32 to vector<8x1xf32>
    %77 = arith.mulf %75, %76 : vector<8x1xf32>
    %78 = arith.mulf %73, %73 : vector<8x128xf32>
    %cst_35 = arith.constant dense<0.000000e+00> : vector<8xf32>
    %79 = vector.multi_reduction <add>, %78, %cst_35 [1] : vector<8x128xf32> to vector<8xf32>
    %80 = vector.shape_cast %79 : vector<8xf32> to vector<8x1xf32>
    %cst_36 = arith.constant 6.250000e-02 : f32
    %81 = vector.broadcast %cst_36 : f32 to vector<8x1xf32>
    %82 = arith.mulf %80, %81 : vector<8x1xf32>
    %83 = arith.mulf %77, %77 : vector<8x1xf32>
    %84 = arith.subf %82, %83 : vector<8x1xf32>
    %cst_37 = arith.constant 0.000000e+00 : f32
    %85 = vector.broadcast %cst_37 : f32 to vector<8x1xf32>
    %86 = arith.maximumf %84, %85 : vector<8x1xf32>
    %87 = vector.broadcast %77 : vector<8x1xf32> to vector<8x128xf32>
    %88 = arith.subf %73, %87 : vector<8x128xf32>
    %cst_38 = arith.constant 9.99999974E-6 : f32
    %89 = vector.broadcast %cst_38 : f32 to vector<8x1xf32>
    %90 = arith.addf %86, %89 : vector<8x1xf32>
    %91 = math.rsqrt %90 : vector<8x1xf32>
    %92 = vector.broadcast %91 : vector<8x1xf32> to vector<8x128xf32>
    %93 = arith.mulf %88, %92 : vector<8x128xf32>
    %c7 = arith.constant 7 : index
    %c0_39 = arith.constant 0 : index
    %94 = vector.load %arg4[%c7, %c0_39] : memref<16x128xf32, #tpu.memory_space<vmem>>, vector<1x128xf32>
    %95 = vector.broadcast %94 : vector<1x128xf32> to vector<8x128xf32>
    %96 = arith.mulf %93, %95 : vector<8x128xf32>
    %c8 = arith.constant 8 : index
    %c0_40 = arith.constant 0 : index
    %97 = vector.load %arg4[%c8, %c0_40] : memref<16x128xf32, #tpu.memory_space<vmem>>, vector<1x128xf32>
    %98 = vector.broadcast %97 : vector<1x128xf32> to vector<8x128xf32>
    %99 = arith.addf %96, %98 : vector<8x128xf32>
    %cst_41 = arith.constant 0.000000e+00 : f32
    %100 = vector.broadcast %cst_41 : f32 to vector<8x128xf32>
    %101 = arith.maximumf %99, %100 : vector<8x128xf32>
    %c2_42 = arith.constant 2 : index
    %c0_43 = arith.constant 0 : index
    %c0_44 = arith.constant 0 : index
    %102 = vector.load %arg3[%c2_42, %c0_43, %c0_44] : memref<4x128x128xf32, #tpu.memory_space<vmem>>, vector<1x128x128xf32>
    %103 = vector.shape_cast %102 : vector<1x128x128xf32> to vector<128x128xf32>
    %cst_45 = arith.constant dense<0.000000e+00> : vector<8x128xf32>
    %104 = tpu.matmul %101, %103, %cst_45 {dimension_numbers = #tpu.dot_dimension_numbers<[1], [0], [0], [1], [0, 0, 1, 1], [], []>} : vector<8x128xf32>, vector<128x128xf32>, vector<8x128xf32> -> vector<8x128xf32>
    %c9 = arith.constant 9 : index
    %c0_46 = arith.constant 0 : index
    %105 = vector.load %arg4[%c9, %c0_46] : memref<16x128xf32, #tpu.memory_space<vmem>>, vector<1x128xf32>
    %106 = vector.broadcast %105 : vector<1x128xf32> to vector<8x128xf32>
    %107 = arith.addf %104, %106 : vector<8x128xf32>
    %cst_47 = arith.constant 0.000000e+00 : f32
    %108 = vector.broadcast %cst_47 : f32 to vector<8x128xf32>
    %109 = arith.maximumf %107, %108 : vector<8x128xf32>
    %c3_48 = arith.constant 3 : index
    %c0_49 = arith.constant 0 : index
    %c0_50 = arith.constant 0 : index
    %110 = vector.load %arg3[%c3_48, %c0_49, %c0_50] : memref<4x128x128xf32, #tpu.memory_space<vmem>>, vector<1x128x128xf32>
    %111 = vector.shape_cast %110 : vector<1x128x128xf32> to vector<128x128xf32>
    %cst_51 = arith.constant dense<0.000000e+00> : vector<8x128xf32>
    %112 = tpu.matmul %109, %111, %cst_51 {dimension_numbers = #tpu.dot_dimension_numbers<[1], [0], [0], [1], [0, 0, 1, 1], [], []>} : vector<8x128xf32>, vector<128x128xf32>, vector<8x128xf32> -> vector<8x128xf32>
    %c10 = arith.constant 10 : index
    %c0_52 = arith.constant 0 : index
    %113 = vector.load %arg4[%c10, %c0_52] : memref<16x128xf32, #tpu.memory_space<vmem>>, vector<1x128xf32>
    %114 = vector.broadcast %113 : vector<1x128xf32> to vector<8x128xf32>
    %115 = arith.addf %112, %114 : vector<8x128xf32>
    %116 = vector.extract_strided_slice %115 {offsets = [0, 6], sizes = [8, 1], strides = [1, 1]} : vector<8x128xf32> to vector<8x1xf32>
    %cst_53 = arith.constant dense<0.000000e+00> : vector<8xf32>
    %117 = vector.multi_reduction <add>, %115, %cst_53 [1] : vector<8x128xf32> to vector<8xf32>
    %118 = vector.shape_cast %117 : vector<8xf32> to vector<8x1xf32>
    %119 = arith.subf %118, %116 : vector<8x1xf32>
    %cst_54 = arith.constant 0.166666672 : f32
    %120 = vector.broadcast %cst_54 : f32 to vector<8x1xf32>
    %121 = arith.mulf %119, %120 : vector<8x1xf32>
    %122 = vector.broadcast %116 : vector<8x1xf32> to vector<8x128xf32>
    %123 = arith.addf %115, %122 : vector<8x128xf32>
    %124 = vector.broadcast %121 : vector<8x1xf32> to vector<8x128xf32>
    %125 = arith.subf %123, %124 : vector<8x128xf32>
    %c11 = arith.constant 11 : index
    %c0_55 = arith.constant 0 : index
    %126 = vector.load %arg4[%c11, %c0_55] : memref<16x128xf32, #tpu.memory_space<vmem>>, vector<1x128xf32>
    %127 = vector.broadcast %126 : vector<1x128xf32> to vector<8x128xf32>
    %128 = arith.mulf %125, %127 : vector<8x128xf32>
    %c0_56 = arith.constant 0 : index
    %c0_57 = arith.constant 0 : index
    %129 = vector.load %arg5[%c0_56, %c0_57] : memref<8x128xf32, #tpu.memory_space<vmem>>, vector<8x128xf32>
    tpu.vector_store %arg5[%c0_56, %c0_57], %128 {strides = array<i32>} : memref<8x128xf32, #tpu.memory_space<vmem>>, vector<8x128xf32>,
    return
  }
  func.func @transform_0(%arg0: i32) -> (i32, i32) {
    %c0_i32 = arith.constant 0 : i32
    %c0_i32_0 = arith.constant 0 : i32
    return %arg0, %c0_i32 : i32, i32
  }
  func.func @transform_1(%arg0: i32) -> (i32, i32) {
    %c0_i32 = arith.constant 0 : i32
    %c0_i32_0 = arith.constant 0 : i32
    %c0_i32_1 = arith.constant 0 : i32
    return %c0_i32, %c0_i32_0 : i32, i32
  }
  func.func @transform_2(%arg0: i32) -> (i32, i32, i32) {
    %c0_i32 = arith.constant 0 : i32
    %c0_i32_0 = arith.constant 0 : i32
    %c0_i32_1 = arith.constant 0 : i32
    %c0_i32_2 = arith.constant 0 : i32
    return %c0_i32, %c0_i32_0, %c0_i32_1 : i32, i32, i32
  }
  func.func @transform_3(%arg0: i32) -> (i32, i32) {
    %c0_i32 = arith.constant 0 : i32
    %c0_i32_0 = arith.constant 0 : i32
    %c0_i32_1 = arith.constant 0 : i32
    return %c0_i32, %c0_i32_0 : i32, i32
  }
  func.func @transform_4(%arg0: i32) -> (i32, i32) {
    %c0_i32 = arith.constant 0 : i32
    %c0_i32_0 = arith.constant 0 : i32
    return %arg0, %c0_i32 : i32, i32
  }
}

</mosaic_0001>

<llo_original>
// kernel: tpu_custom_call.1
$region0: #{tpu_custom_call.1}
  #allocation0 [shape = 'u32[]', space=smem, size = 0x4, offset = 0x4, fixed_abs, tag = 'smem constant byte address 0x4 - core index']
  #allocation1 [shape = 'u32[144,128]{1,0:T(1,128)}', space=vmem, size = 0x12000, scoped, tag = 'internal scratch']
  %s0 = inlined_call_operand.hbm [shape: f32[8,32], index: 0, kind: input, shape index: {}]
  %s1 = inlined_call_operand.hbm [shape: f32[32,128], index: 1, kind: input, shape index: {}]
  %s2 = inlined_call_operand.hbm [shape: f32[4,128,128], index: 2, kind: input, shape index: {}]
  %s3 = inlined_call_operand.hbm [shape: f32[16,128], index: 3, kind: input, shape index: {}]
  %s4 = inlined_call_operand.hbm [shape: f32[8,128], index: 4, kind: output, shape index: {}]
  %s5 = sld [smem:[#allocation0]]
  $region42: #{tpu_custom_call.1} parent=0
    _
  %s7 = ssub.s32 1, %s5
  %s8 = scalar_select 0, %s7, %s5
  $region1: #{tpu_custom_call.1} parent=0
    #allocation2 [shape = 'u8[4096]{0}', space=vmem, size = 0x1000, scoped, tag = 'input window, operand 0, single buffered']
    #allocation3 [shape = 's32[1]{0}', space=sflag, size = 0x4, scoped, tag = 'scoped memory for tpu_custom_call.1']
    #allocation4 [shape = 's32[1]{0}', space=sflag, size = 0x4, scoped, tag = 'scoped memory for tpu_custom_call.1']
    #allocation5 [shape = 'u8[16384]{0}', space=vmem, size = 0x4000, scoped, tag = 'input window, operand 1, single buffered']
    #allocation6 [shape = 's32[1]{0}', space=sflag, size = 0x4, scoped, tag = 'scoped memory for tpu_custom_call.1']
    #allocation7 [shape = 'u8[262144]{0}', space=vmem, size = 0x40000, scoped, tag = 'input window, operand 2, single buffered']
    #allocation8 [shape = 'u8[8192]{0}', space=vmem, size = 0x2000, scoped, tag = 'input window, operand 3, single buffered']
    #allocation9 [shape = 's32[1]{0}', space=sflag, size = 0x4, scoped, tag = 'scoped memory for tpu_custom_call.1']
    #allocation10 [shape = 'u8[4096]{0}', space=vmem, size = 0x1000, scoped, tag = 'output window, operand 0, single buffered']
    %9 = vsyncpa [#allocation3], 0
    %10 = vsyncpa [#allocation6], 0
    %11 = vsyncpa [#allocation9], 0
    %12 = vsyncpa [#allocation4], 0
    // Predicated region
    $region2: #{tpu_custom_call.1} parent=1 // pred_check
      _
    $region3: #{tpu_custom_call.1} parent=1 // pred_check_branch
      %14 = sbr.rel (0) target = $region5
    $region4: #{tpu_custom_call.1} parent=1 // pred_region
      %s16 = ssub.s32 128, 128
      %17 = vsyncadd [#allocation3], %s16
      %s19 = sshll.u32 [#allocation2], 4
      %s20 = int_to_ptr.vmem [resolvable:$true] %s19
      %22 = dma.hbm_to_vmem [thread:$0]  %s0, 128, %s20, [#allocation3]
    $region5: #{tpu_custom_call.1} parent=1 // pred_fallthru
      _
    // Predicated region
    $region6: #{tpu_custom_call.1} parent=1 // pred_check
      _
    $region7: #{tpu_custom_call.1} parent=1 // pred_check_branch
      %24 = sbr.rel (0) target = $region9
    $region8: #{tpu_custom_call.1} parent=1 // pred_region
      %s26 = ssub.s32 512, 512
      %27 = vsyncadd [#allocation6], %s26
      %s28 = sshll.u32 [#allocation5], 4
      %s29 = int_to_ptr.vmem [resolvable:$true] %s28
      %34 = dma.hbm_to_vmem [thread:$0]  %s1, 512, %s29, [#allocation6], 128, 128, 8
    $region9: #{tpu_custom_call.1} parent=1 // pred_fallthru
      _
    // Predicated region
    $region10: #{tpu_custom_call.1} parent=1 // pred_check
      _
    $region11: #{tpu_custom_call.1} parent=1 // pred_check_branch
      %36 = sbr.rel (0) target = $region13
    $region12: #{tpu_custom_call.1} parent=1 // pred_region
      %s38 = ssub.s32 8192, 8192
      %39 = vsyncadd [#allocation6], %s38
      %s40 = sshll.u32 [#allocation7], 4
      %s41 = int_to_ptr.vmem [resolvable:$true] %s40
      %46 = dma.hbm_to_vmem [thread:$0]  %s2, 8192, %s41, [#allocation6], 128, 128, 8
    $region13: #{tpu_custom_call.1} parent=1 // pred_fallthru
      _
    // Predicated region
    $region14: #{tpu_custom_call.1} parent=1 // pred_check
      _
    $region15: #{tpu_custom_call.1} parent=1 // pred_check_branch
      %48 = sbr.rel (0) target = $region17
    $region16: #{tpu_custom_call.1} parent=1 // pred_region
      %s50 = ssub.s32 256, 256
      %51 = vsyncadd [#allocation9], %s50
      %s52 = sshll.u32 [#allocation8], 4
      %s53 = int_to_ptr.vmem [resolvable:$true] %s52
      %58 = dma.hbm_to_vmem [thread:$0]  %s3, 256, %s53, [#allocation9], 128, 128, 8
    $region17: #{tpu_custom_call.1} parent=1 // pred_fallthru
      _
    // Predicated region
    $region18: #{tpu_custom_call.1} parent=1 // pred_check
      _
    $region19: #{tpu_custom_call.1} parent=1 // pred_check_branch
      %60 = sbr.rel (0) target = $region21
    $region20: #{tpu_custom_call.1} parent=1 // pred_region
      %61 = dma.done [#allocation3], 128
    $region21: #{tpu_custom_call.1} parent=1 // pred_fallthru
      _
    // Predicated region
    $region22: #{tpu_custom_call.1} parent=1 // pred_check
      _
    $region23: #{tpu_custom_call.1} parent=1 // pred_check_branch
      %63 = sbr.rel (0) target = $region25
    $region24: #{tpu_custom_call.1} parent=1 // pred_region
      %64 = dma.done [#allocation6], 512
    $region25: #{tpu_custom_call.1} parent=1 // pred_fallthru
      _
    // Predicated region
    $region26: #{tpu_custom_call.1} parent=1 // pred_check
      _
    $region27: #{tpu_custom_call.1} parent=1 // pred_check_branch
      %66 = sbr.rel (0) target = $region29
    $region28: #{tpu_custom_call.1} parent=1 // pred_region
      %67 = dma.done [#allocation6], 8192
    $region29: #{tpu_custom_call.1} parent=1 // pred_fallthru
      _
    // Predicated region
    $region30: #{tpu_custom_call.1} parent=1 // pred_check
      _
    $region31: #{tpu_custom_call.1} parent=1 // pred_check_branch
      %69 = sbr.rel (0) target = $region33
    $region32: #{tpu_custom_call.1} parent=1 // pred_region
      %70 = dma.done [#allocation9], 256
    $region33: #{tpu_custom_call.1} parent=1 // pred_fallthru
      _
    %v71 = vld [vmem:[#allocation2] sm:$0xff]
    %v72 = vld [vmem:[#allocation5] sm:$0xff]
    %v73 = vld [vmem:[#allocation5 + $0x8] sm:$0xff]
    %v74 = vld [vmem:[#allocation5 + $0x10] sm:$0xff]
    %v75 = vld [vmem:[#allocation5 + $0x18] sm:$0xff]
    %v76 = vld [vmem:[#allocation8] sm:$0x1]
    %v77 = vlaneseq
    %v78 = vshrl.u32 %v77, 7
    %v79 = vsub.s32 0, %v78
    %v80 = vrot.slane %v76, %v79
    %vm81 = vcmask 261120
    %v83 = vsel %vm81, %v71, 0
    %85 = vmatprep.subr.mxu0 0.0
    %86 = vmatpush1.msra.mxu0 %v72
    %87 = vmatprep.subr.mxu0 0.0
    %88 = vmatpush1.msra.mxu0 %v73
    %89 = vmatprep.subr.mxu0 0.0
    %90 = vmatpush1.msra.mxu0 %v74
    %91 = vmatprep.subr.mxu0 0.0
    %92 = vmatpush1.msra.mxu0 %v75
    %93 = vmatprep.subr.mxu0 0.0
    %94 = vmatpush1.msra.mxu0 0.0
    %95 = vmatprep.subr.mxu0 0.0
    %96 = vmatpush1.msra.mxu0 0.0
    %97 = vmatprep.subr.mxu0 0.0
    %98 = vmatpush1.msra.mxu0 0.0
    %99 = vmatprep.subr.mxu0 0.0
    %100 = vmatpush1.msra.mxu0 0.0
    %101 = vmatprep.subr.mxu0 0.0
    %102 = vmatpush1.msra.mxu0 0.0
    %103 = vmatprep.subr.mxu0 0.0
    %104 = vmatpush1.msra.mxu0 0.0
    %105 = vmatprep.subr.mxu0 0.0
    %106 = vmatpush1.msra.mxu0 0.0
    %107 = vmatprep.subr.mxu0 0.0
    %108 = vmatpush1.msra.mxu0 0.0
    %109 = vmatprep.subr.mxu0 0.0
    %110 = vmatpush1.msra.mxu0 0.0
    %111 = vmatprep.subr.mxu0 0.0
    %112 = vmatpush1.msra.mxu0 0.0
    %113 = vmatprep.subr.mxu0 0.0
    %114 = vmatpush1.msra.mxu0 0.0
    %115 = vmatprep.subr.mxu0 0.0
    %116 = vmatpush1.msra.mxu0 0.0
    %117 = vmatprep.subr.mxu0 0.0
    %118 = vmatpush1.msra.mxu0 0.0
    %119 = vmatprep.subr.mxu0 0.0
    %120 = vmatpush1.msra.mxu0 0.0
    %121 = vmatprep.subr.mxu0 0.0
    %122 = vmatpush1.msra.mxu0 0.0
    %123 = vmatprep.subr.mxu0 0.0
    %124 = vmatpush1.msra.mxu0 0.0
    %125 = vmatprep.subr.mxu0 0.0
    %126 = vmatpush1.msra.mxu0 0.0
    %127 = vmatprep.subr.mxu0 0.0
    %128 = vmatpush1.msra.mxu0 0.0
    %129 = vmatprep.subr.mxu0 0.0
    %130 = vmatpush1.msra.mxu0 0.0
    %131 = vmatprep.subr.mxu0 0.0
    %132 = vmatpush1.msra.mxu0 0.0
    %133 = vmatprep.subr.mxu0 0.0
    %134 = vmatpush1.msra.mxu0 0.0
    %135 = vmatprep.subr.mxu0 0.0
    %136 = vmatpush1.msra.mxu0 0.0
    %137 = vmatprep.subr.mxu0 0.0
    %138 = vmatpush1.msra.mxu0 0.0
    %139 = vmatprep.subr.mxu0 0.0
    %140 = vmatpush1.msra.mxu0 0.0
    %141 = vmatprep.subr.mxu0 0.0
    %142 = vmatpush1.msra.mxu0 0.0
    %143 = vmatprep.subr.mxu0 0.0
    %144 = vmatpush1.msra.mxu0 0.0
    %145 = vmatprep.subr.mxu0 0.0
    %146 = vmatpush1.msra.mxu0 0.0
    %147 = vmatprep.subr.mxu0 0.0
    %148 = vmatpush1.msra.mxu0 0.0
    %149 = vmatprep.mubr.f32.mxu0 0.0
    %150 = vmatmul.mubr.f32.gmra.mrb[0].mxu0 %v83
    %v151 = vpop.f32.mrb[0].mxu0
    %v152 = vadd.f32 %v80, %v151
    %v153 = vpop.f32.mrb[0].mxu0
    %154 = vdwg.mxu0
    %155 = vadd.xlane.f32.xlu0 %v152
    %v156 = vpop.xlane.xlu0 %155
    %v157 = vmul.f32 %v156, 0.015625
    %v158 = vmul.f32 %v152, %v152
    %159 = vadd.xlane.f32.xlu0 %v158
    %v160 = vpop.xlane.xlu0 %159
    %v161 = vmul.f32 %v160, 0.015625
    %v162 = vmul.f32 %v157, %v157
    %v163 = vsub.f32 %v161, %v162
    %v164 = vmax.f32 %v163, 0.0
    %v165 = vsub.f32 %v152, %v157
    %v166 = vadd.f32 %v164, 1e-05
    %v167 = vrsqrt.pop %v166
    %v168 = vmul.f32 %v165, %v167
    %v169 = vld [vmem:[#allocation8 + $0x1] sm:$0x1]
    %v170 = vlaneseq
    %v171 = vshrl.u32 %v170, 7
    %v172 = vsub.s32 0, %v171
    %v173 = vrot.slane %v169, %v172
    %v174 = vmul.f32 %v168, %v173
    %v175 = vld [vmem:[#allocation8 + $0x2] sm:$0x1]
    %v176 = vlaneseq
    %v177 = vshrl.u32 %v176, 7
    %v178 = vsub.s32 0, %v177
    %v179 = vrot.slane %v175, %v178
    %v180 = vadd.f32 %v174, %v179
    %v181 = vmax.f32 %v180, 0.0
    %v182 = vld [vmem:[#allocation7] sm:$0xff]
    %v183 = vld [vmem:[#allocation7 + $0x8] sm:$0xff]
    %v184 = vld [vmem:[#allocation7 + $0x10] sm:$0xff]
    %v185 = vld [vmem:[#allocation7 + $0x18] sm:$0xff]
    %v186 = vld [vmem:[#allocation7 + $0x20] sm:$0xff]
    %v187 = vld [vmem:[#allocation7 + $0x28] sm:$0xff]
    %v188 = vld [vmem:[#allocation7 + $0x30] sm:$0xff]
    %v189 = vld [vmem:[#allocation7 + $0x38] sm:$0xff]
    %v190 = vld [vmem:[#allocation7 + $0x40] sm:$0xff]
    %v191 = vld [vmem:[#allocation7 + $0x48] sm:$0xff]
    %v192 = vld [vmem:[#allocation7 + $0x50] sm:$0xff]
    %v193 = vld [vmem:[#allocation7 + $0x58] sm:$0xff]
    %v194 = vld [vmem:[#allocation7 + $0x60] sm:$0xff]
    %v195 = vld [vmem:[#allocation7 + $0x68] sm:$0xff]
    %v196 = vld [vmem:[#allocation7 + $0x70] sm:$0xff]
    %v197 = vld [vmem:[#allocation7 + $0x78] sm:$0xff]
    %v198 = vld [vmem:[#allocation8 + $0x3] sm:$0x1]
    %v199 = vlaneseq
    %v200 = vshrl.u32 %v199, 7
    %v201 = vsub.s32 0, %v200
    %v202 = vrot.slane %v198, %v201
    %203 = vmatprep.subr.mxu0 0.0
    %204 = vmatpush1.msra.mxu0 %v182
    %205 = vmatprep.subr.mxu0 0.0
    %206 = vmatpush1.msra.mxu0 %v183
    %207 = vmatprep.subr.mxu0 0.0
    %208 = vmatpush1.msra.mxu0 %v184
    %209 = vmatprep.subr.mxu0 0.0
    %210 = vmatpush1.msra.mxu0 %v185
    %211 = vmatprep.subr.mxu0 0.0
    %212 = vmatpush1.msra.mxu0 %v186
    %213 = vmatprep.subr.mxu0 0.0
    %214 = vmatpush1.msra.mxu0 %v187
    %215 = vmatprep.subr.mxu0 0.0
    %216 = vmatpush1.msra.mxu0 %v188
    %217 = vmatprep.subr.mxu0 0.0
    %218 = vmatpush1.msra.mxu0 %v189
    %219 = vmatprep.subr.mxu0 0.0
    %220 = vmatpush1.msra.mxu0 %v190
    %221 = vmatprep.subr.mxu0 0.0
    %222 = vmatpush1.msra.mxu0 %v191
    %223 = vmatprep.subr.mxu0 0.0
    %224 = vmatpush1.msra.mxu0 %v192
    %225 = vmatprep.subr.mxu0 0.0
    %226 = vmatpush1.msra.mxu0 %v193
    %227 = vmatprep.subr.mxu0 0.0
    %228 = vmatpush1.msra.mxu0 %v194
    %229 = vmatprep.subr.mxu0 0.0
    %230 = vmatpush1.msra.mxu0 %v195
    %231 = vmatprep.subr.mxu0 0.0
    %232 = vmatpush1.msra.mxu0 %v196
    %233 = vmatprep.subr.mxu0 0.0
    %234 = vmatpush1.msra.mxu0 %v197
    %235 = vmatprep.subr.mxu0 0.0
    %236 = vmatpush1.msra.mxu0 0.0
    %237 = vmatprep.subr.mxu0 0.0
    %238 = vmatpush1.msra.mxu0 0.0
    %239 = vmatprep.subr.mxu0 0.0
    %240 = vmatpush1.msra.mxu0 0.0
    %241 = vmatprep.subr.mxu0 0.0
    %242 = vmatpush1.msra.mxu0 0.0
    %243 = vmatprep.subr.mxu0 0.0
    %244 = vmatpush1.msra.mxu0 0.0
    %245 = vmatprep.subr.mxu0 0.0
    %246 = vmatpush1.msra.mxu0 0.0
    %247 = vmatprep.subr.mxu0 0.0
    %248 = vmatpush1.msra.mxu0 0.0
    %249 = vmatprep.subr.mxu0 0.0
    %250 = vmatpush1.msra.mxu0 0.0
    %251 = vmatprep.subr.mxu0 0.0
    %252 = vmatpush1.msra.mxu0 0.0
    %253 = vmatprep.subr.mxu0 0.0
    %254 = vmatpush1.msra.mxu0 0.0
    %255 = vmatprep.subr.mxu0 0.0
    %256 = vmatpush1.msra.mxu0 0.0
    %257 = vmatprep.subr.mxu0 0.0
    %258 = vmatpush1.msra.mxu0 0.0
    %259 = vmatprep.subr.mxu0 0.0
    %260 = vmatpush1.msra.mxu0 0.0
    %261 = vmatprep.subr.mxu0 0.0
    %262 = vmatpush1.msra.mxu0 0.0
    %263 = vmatprep.subr.mxu0 0.0
    %264 = vmatpush1.msra.mxu0 0.0
    %265 = vmatprep.subr.mxu0 0.0
    %266 = vmatpush1.msra.mxu0 0.0
    %267 = vmatprep.mubr.f32.mxu0 0.0
    %268 = vmatmul.mubr.f32.gmra.mrb[0].mxu0 %v181
    %v269 = vpop.f32.mrb[0].mxu0
    %v270 = vadd.f32 %v202, %v269
    %v271 = vpop.f32.mrb[0].mxu0
    %272 = vdwg.mxu0
    %273 = vadd.xlane.f32.xlu0 %v270
    %v274 = vpop.xlane.xlu0 %273
    %v275 = vmul.f32 %v274, 0.03125
    %v276 = vmul.f32 %v270, %v270
    %277 = vadd.xlane.f32.xlu0 %v276
    %v278 = vpop.xlane.xlu0 %277
    %v279 = vmul.f32 %v278, 0.03125
    %v280 = vmul.f32 %v275, %v275
    %v281 = vsub.f32 %v279, %v280
    %v282 = vmax.f32 %v281, 0.0
    %v283 = vsub.f32 %v270, %v275
    %v284 = vadd.f32 %v282, 1e-05
    %v285 = vrsqrt.pop %v284
    %v286 = vmul.f32 %v283, %v285
    %v287 = vld [vmem:[#allocation8 + $0x4] sm:$0x1]
    %v288 = vlaneseq
    %v289 = vshrl.u32 %v288, 7
    %v290 = vsub.s32 0, %v289
    %v291 = vrot.slane %v287, %v290
    %v292 = vmul.f32 %v286, %v291
    %v293 = vld [vmem:[#allocation8 + $0x5] sm:$0x1]
    %v294 = vlaneseq
    %v295 = vshrl.u32 %v294, 7
    %v296 = vsub.s32 0, %v295
    %v297 = vrot.slane %v293, %v296
    %v298 = vadd.f32 %v292, %v297
    %v299 = vmax.f32 %v298, 0.0
    %s300 = scalar_lea.vmem [#allocation7], 128
    %v301 = vld [vmem:[%s300] sm:$0xff]
    %v302 = vld [vmem:[%s300 + $0x8] sm:$0xff]
    %v303 = vld [vmem:[%s300 + $0x10] sm:$0xff]
    %v304 = vld [vmem:[%s300 + $0x18] sm:$0xff]
    %v305 = vld [vmem:[%s300 + $0x20] sm:$0xff]
    %v306 = vld [vmem:[%s300 + $0x28] sm:$0xff]
    %v307 = vld [vmem:[%s300 + $0x30] sm:$0xff]
    %v308 = vld [vmem:[%s300 + $0x38] sm:$0xff]
    %v309 = vld [vmem:[%s300 + $0x40] sm:$0xff]
    %v310 = vld [vmem:[%s300 + $0x48] sm:$0xff]
    %v311 = vld [vmem:[%s300 + $0x50] sm:$0xff]
    %v312 = vld [vmem:[%s300 + $0x58] sm:$0xff]
    %v313 = vld [vmem:[%s300 + $0x60] sm:$0xff]
    %v314 = vld [vmem:[%s300 + $0x68] sm:$0xff]
    %v315 = vld [vmem:[%s300 + $0x70] sm:$0xff]
    %v316 = vld [vmem:[%s300 + $0x78] sm:$0xff]
    %v317 = vld [vmem:[#allocation8 + $0x6] sm:$0x1]
    %v318 = vlaneseq
    %v319 = vshrl.u32 %v318, 7
    %v320 = vsub.s32 0, %v319
    %v321 = vrot.slane %v317, %v320
    %322 = vmatprep.subr.mxu0 0.0
    %323 = vmatpush1.msra.mxu0 %v301
    %324 = vmatprep.subr.mxu0 0.0
    %325 = vmatpush1.msra.mxu0 %v302
    %326 = vmatprep.subr.mxu0 0.0
    %327 = vmatpush1.msra.mxu0 %v303
    %328 = vmatprep.subr.mxu0 0.0
    %329 = vmatpush1.msra.mxu0 %v304
    %330 = vmatprep.subr.mxu0 0.0
    %331 = vmatpush1.msra.mxu0 %v305
    %332 = vmatprep.subr.mxu0 0.0
    %333 = vmatpush1.msra.mxu0 %v306
    %334 = vmatprep.subr.mxu0 0.0
    %335 = vmatpush1.msra.mxu0 %v307
    %336 = vmatprep.subr.mxu0 0.0
    %337 = vmatpush1.msra.mxu0 %v308
    %338 = vmatprep.subr.mxu0 0.0
    %339 = vmatpush1.msra.mxu0 %v309
    %340 = vmatprep.subr.mxu0 0.0
    %341 = vmatpush1.msra.mxu0 %v310
    %342 = vmatprep.subr.mxu0 0.0
    %343 = vmatpush1.msra.mxu0 %v311
    %344 = vmatprep.subr.mxu0 0.0
    %345 = vmatpush1.msra.mxu0 %v312
    %346 = vmatprep.subr.mxu0 0.0
    %347 = vmatpush1.msra.mxu0 %v313
    %348 = vmatprep.subr.mxu0 0.0
    %349 = vmatpush1.msra.mxu0 %v314
    %350 = vmatprep.subr.mxu0 0.0
    %351 = vmatpush1.msra.mxu0 %v315
    %352 = vmatprep.subr.mxu0 0.0
    %353 = vmatpush1.msra.mxu0 %v316
    %354 = vmatprep.subr.mxu0 0.0
    %355 = vmatpush1.msra.mxu0 0.0
    %356 = vmatprep.subr.mxu0 0.0
    %357 = vmatpush1.msra.mxu0 0.0
    %358 = vmatprep.subr.mxu0 0.0
    %359 = vmatpush1.msra.mxu0 0.0
    %360 = vmatprep.subr.mxu0 0.0
    %361 = vmatpush1.msra.mxu0 0.0
    %362 = vmatprep.subr.mxu0 0.0
    %363 = vmatpush1.msra.mxu0 0.0
    %364 = vmatprep.subr.mxu0 0.0
    %365 = vmatpush1.msra.mxu0 0.0
    %366 = vmatprep.subr.mxu0 0.0
    %367 = vmatpush1.msra.mxu0 0.0
    %368 = vmatprep.subr.mxu0 0.0
    %369 = vmatpush1.msra.mxu0 0.0
    %370 = vmatprep.subr.mxu0 0.0
    %371 = vmatpush1.msra.mxu0 0.0
    %372 = vmatprep.subr.mxu0 0.0
    %373 = vmatpush1.msra.mxu0 0.0
    %374 = vmatprep.subr.mxu0 0.0
    %375 = vmatpush1.msra.mxu0 0.0
    %376 = vmatprep.subr.mxu0 0.0
    %377 = vmatpush1.msra.mxu0 0.0
    %378 = vmatprep.subr.mxu0 0.0
    %379 = vmatpush1.msra.mxu0 0.0
    %380 = vmatprep.subr.mxu0 0.0
    %381 = vmatpush1.msra.mxu0 0.0
    %382 = vmatprep.subr.mxu0 0.0
    %383 = vmatpush1.msra.mxu0 0.0
    %384 = vmatprep.subr.mxu0 0.0
    %385 = vmatpush1.msra.mxu0 0.0
    %386 = vmatprep.mubr.f32.mxu0 0.0
    %387 = vmatmul.mubr.f32.gmra.mrb[0].mxu0 %v299
    %v388 = vpop.f32.mrb[0].mxu0
    %v389 = vadd.f32 %v321, %v388
    %v390 = vpop.f32.mrb[0].mxu0
    %391 = vdwg.mxu0
    %392 = vadd.xlane.f32.xlu0 %v389
    %v393 = vpop.xlane.xlu0 %392
    %v394 = vmul.f32 %v393, 0.0625
    %v395 = vmul.f32 %v389, %v389
    %396 = vadd.xlane.f32.xlu0 %v395
    %v397 = vpop.xlane.xlu0 %396
    %v398 = vmul.f32 %v397, 0.0625
    %v399 = vmul.f32 %v394, %v394
    %v400 = vsub.f32 %v398, %v399
    %v401 = vmax.f32 %v400, 0.0
    %v402 = vsub.f32 %v389, %v394
    %v403 = vadd.f32 %v401, 1e-05
    %v404 = vrsqrt.pop %v403
    %v405 = vmul.f32 %v402, %v404
    %v406 = vld [vmem:[#allocation8 + $0x7] sm:$0x1]
    %v407 = vlaneseq
    %v408 = vshrl.u32 %v407, 7
    %v409 = vsub.s32 0, %v408
    %v410 = vrot.slane %v406, %v409
    %v411 = vmul.f32 %v405, %v410
    %v412 = vld [vmem:[#allocation8 + $0x8] sm:$0x1]
    %v413 = vlaneseq
    %v414 = vshrl.u32 %v413, 7
    %v415 = vsub.s32 0, %v414
    %v416 = vrot.slane %v412, %v415
    %v417 = vadd.f32 %v411, %v416
    %v418 = vmax.f32 %v417, 0.0
    %s419 = scalar_lea.vmem [#allocation7], 256
    %v420 = vld [vmem:[%s419] sm:$0xff]
    %v421 = vld [vmem:[%s419 + $0x8] sm:$0xff]
    %v422 = vld [vmem:[%s419 + $0x10] sm:$0xff]
    %v423 = vld [vmem:[%s419 + $0x18] sm:$0xff]
    %v424 = vld [vmem:[%s419 + $0x20] sm:$0xff]
    %v425 = vld [vmem:[%s419 + $0x28] sm:$0xff]
    %v426 = vld [vmem:[%s419 + $0x30] sm:$0xff]
    %v427 = vld [vmem:[%s419 + $0x38] sm:$0xff]
    %v428 = vld [vmem:[%s419 + $0x40] sm:$0xff]
    %v429 = vld [vmem:[%s419 + $0x48] sm:$0xff]
    %v430 = vld [vmem:[%s419 + $0x50] sm:$0xff]
    %v431 = vld [vmem:[%s419 + $0x58] sm:$0xff]
    %v432 = vld [vmem:[%s419 + $0x60] sm:$0xff]
    %v433 = vld [vmem:[%s419 + $0x68] sm:$0xff]
    %v434 = vld [vmem:[%s419 + $0x70] sm:$0xff]
    %v435 = vld [vmem:[%s419 + $0x78] sm:$0xff]
    %v436 = vld [vmem:[#allocation8 + $0x9] sm:$0x1]
    %v437 = vlaneseq
    %v438 = vshrl.u32 %v437, 7
    %v439 = vsub.s32 0, %v438
    %v440 = vrot.slane %v436, %v439
    %441 = vmatprep.subr.mxu0 0.0
    %442 = vmatpush1.msra.mxu0 %v420
    %443 = vmatprep.subr.mxu0 0.0
    %444 = vmatpush1.msra.mxu0 %v421
    %445 = vmatprep.subr.mxu0 0.0
    %446 = vmatpush1.msra.mxu0 %v422
    %447 = vmatprep.subr.mxu0 0.0
    %448 = vmatpush1.msra.mxu0 %v423
    %449 = vmatprep.subr.mxu0 0.0
    %450 = vmatpush1.msra.mxu0 %v424
    %451 = vmatprep.subr.mxu0 0.0
    %452 = vmatpush1.msra.mxu0 %v425
    %453 = vmatprep.subr.mxu0 0.0
    %454 = vmatpush1.msra.mxu0 %v426
    %455 = vmatprep.subr.mxu0 0.0
    %456 = vmatpush1.msra.mxu0 %v427
    %457 = vmatprep.subr.mxu0 0.0
    %458 = vmatpush1.msra.mxu0 %v428
    %459 = vmatprep.subr.mxu0 0.0
    %460 = vmatpush1.msra.mxu0 %v429
    %461 = vmatprep.subr.mxu0 0.0
    %462 = vmatpush1.msra.mxu0 %v430
    %463 = vmatprep.subr.mxu0 0.0
    %464 = vmatpush1.msra.mxu0 %v431
    %465 = vmatprep.subr.mxu0 0.0
    %466 = vmatpush1.msra.mxu0 %v432
    %467 = vmatprep.subr.mxu0 0.0
    %468 = vmatpush1.msra.mxu0 %v433
    %469 = vmatprep.subr.mxu0 0.0
    %470 = vmatpush1.msra.mxu0 %v434
    %471 = vmatprep.subr.mxu0 0.0
    %472 = vmatpush1.msra.mxu0 %v435
    %473 = vmatprep.subr.mxu0 0.0
    %474 = vmatpush1.msra.mxu0 0.0
    %475 = vmatprep.subr.mxu0 0.0
    %476 = vmatpush1.msra.mxu0 0.0
    %477 = vmatprep.subr.mxu0 0.0
    %478 = vmatpush1.msra.mxu0 0.0
    %479 = vmatprep.subr.mxu0 0.0
    %480 = vmatpush1.msra.mxu0 0.0
    %481 = vmatprep.subr.mxu0 0.0
    %482 = vmatpush1.msra.mxu0 0.0
    %483 = vmatprep.subr.mxu0 0.0
    %484 = vmatpush1.msra.mxu0 0.0
    %485 = vmatprep.subr.mxu0 0.0
    %486 = vmatpush1.msra.mxu0 0.0
    %487 = vmatprep.subr.mxu0 0.0
    %488 = vmatpush1.msra.mxu0 0.0
    %489 = vmatprep.subr.mxu0 0.0
    %490 = vmatpush1.msra.mxu0 0.0
    %491 = vmatprep.subr.mxu0 0.0
    %492 = vmatpush1.msra.mxu0 0.0
    %493 = vmatprep.subr.mxu0 0.0
    %494 = vmatpush1.msra.mxu0 0.0
    %495 = vmatprep.subr.mxu0 0.0
    %496 = vmatpush1.msra.mxu0 0.0
    %497 = vmatprep.subr.mxu0 0.0
    %498 = vmatpush1.msra.mxu0 0.0
    %499 = vmatprep.subr.mxu0 0.0
    %500 = vmatpush1.msra.mxu0 0.0
    %501 = vmatprep.subr.mxu0 0.0
    %502 = vmatpush1.msra.mxu0 0.0
    %503 = vmatprep.subr.mxu0 0.0
    %504 = vmatpush1.msra.mxu0 0.0
    %505 = vmatprep.mubr.f32.mxu0 0.0
    %506 = vmatmul.mubr.f32.gmra.mrb[0].mxu0 %v418
    %v507 = vpop.f32.mrb[0].mxu0
    %v508 = vadd.f32 %v440, %v507
    %v509 = vpop.f32.mrb[0].mxu0
    %510 = vdwg.mxu0
    %v511 = vmax.f32 %v508, 0.0
    %s512 = scalar_lea.vmem [#allocation7], 384
    %v513 = vld [vmem:[%s512] sm:$0xff]
    %v514 = vld [vmem:[%s512 + $0x8] sm:$0xff]
    %v515 = vld [vmem:[%s512 + $0x10] sm:$0xff]
    %v516 = vld [vmem:[%s512 + $0x18] sm:$0xff]
    %v517 = vld [vmem:[%s512 + $0x20] sm:$0xff]
    %v518 = vld [vmem:[%s512 + $0x28] sm:$0xff]
    %v519 = vld [vmem:[%s512 + $0x30] sm:$0xff]
    %v520 = vld [vmem:[%s512 + $0x38] sm:$0xff]
    %v521 = vld [vmem:[%s512 + $0x40] sm:$0xff]
    %v522 = vld [vmem:[%s512 + $0x48] sm:$0xff]
    %v523 = vld [vmem:[%s512 + $0x50] sm:$0xff]
    %v524 = vld [vmem:[%s512 + $0x58] sm:$0xff]
    %v525 = vld [vmem:[%s512 + $0x60] sm:$0xff]
    %v526 = vld [vmem:[%s512 + $0x68] sm:$0xff]
    %v527 = vld [vmem:[%s512 + $0x70] sm:$0xff]
    %v528 = vld [vmem:[%s512 + $0x78] sm:$0xff]
    %v529 = vld [vmem:[#allocation8 + $0xa] sm:$0x1]
    %v530 = vlaneseq
    %v531 = vshrl.u32 %v530, 7
    %v532 = vsub.s32 0, %v531
    %v533 = vrot.slane %v529, %v532
    %534 = vmatprep.subr.mxu0 0.0
    %535 = vmatpush1.msra.mxu0 %v513
    %536 = vmatprep.subr.mxu0 0.0
    %537 = vmatpush1.msra.mxu0 %v514
    %538 = vmatprep.subr.mxu0 0.0
    %539 = vmatpush1.msra.mxu0 %v515
    %540 = vmatprep.subr.mxu0 0.0
    %541 = vmatpush1.msra.mxu0 %v516
    %542 = vmatprep.subr.mxu0 0.0
    %543 = vmatpush1.msra.mxu0 %v517
    %544 = vmatprep.subr.mxu0 0.0
    %545 = vmatpush1.msra.mxu0 %v518
    %546 = vmatprep.subr.mxu0 0.0
    %547 = vmatpush1.msra.mxu0 %v519
    %548 = vmatprep.subr.mxu0 0.0
    %549 = vmatpush1.msra.mxu0 %v520
    %550 = vmatprep.subr.mxu0 0.0
    %551 = vmatpush1.msra.mxu0 %v521
    %552 = vmatprep.subr.mxu0 0.0
    %553 = vmatpush1.msra.mxu0 %v522
    %554 = vmatprep.subr.mxu0 0.0
    %555 = vmatpush1.msra.mxu0 %v523
    %556 = vmatprep.subr.mxu0 0.0
    %557 = vmatpush1.msra.mxu0 %v524
    %558 = vmatprep.subr.mxu0 0.0
    %559 = vmatpush1.msra.mxu0 %v525
    %560 = vmatprep.subr.mxu0 0.0
    %561 = vmatpush1.msra.mxu0 %v526
    %562 = vmatprep.subr.mxu0 0.0
    %563 = vmatpush1.msra.mxu0 %v527
    %564 = vmatprep.subr.mxu0 0.0
    %565 = vmatpush1.msra.mxu0 %v528
    %566 = vmatprep.subr.mxu0 0.0
    %567 = vmatpush1.msra.mxu0 0.0
    %568 = vmatprep.subr.mxu0 0.0
    %569 = vmatpush1.msra.mxu0 0.0
    %570 = vmatprep.subr.mxu0 0.0
    %571 = vmatpush1.msra.mxu0 0.0
    %572 = vmatprep.subr.mxu0 0.0
    %573 = vmatpush1.msra.mxu0 0.0
    %574 = vmatprep.subr.mxu0 0.0
    %575 = vmatpush1.msra.mxu0 0.0
    %576 = vmatprep.subr.mxu0 0.0
    %577 = vmatpush1.msra.mxu0 0.0
    %578 = vmatprep.subr.mxu0 0.0
    %579 = vmatpush1.msra.mxu0 0.0
    %580 = vmatprep.subr.mxu0 0.0
    %581 = vmatpush1.msra.mxu0 0.0
    %582 = vmatprep.subr.mxu0 0.0
    %583 = vmatpush1.msra.mxu0 0.0
    %584 = vmatprep.subr.mxu0 0.0
    %585 = vmatpush1.msra.mxu0 0.0
    %586 = vmatprep.subr.mxu0 0.0
    %587 = vmatpush1.msra.mxu0 0.0
    %588 = vmatprep.subr.mxu0 0.0
    %589 = vmatpush1.msra.mxu0 0.0
    %590 = vmatprep.subr.mxu0 0.0
    %591 = vmatpush1.msra.mxu0 0.0
    %592 = vmatprep.subr.mxu0 0.0
    %593 = vmatpush1.msra.mxu0 0.0
    %594 = vmatprep.subr.mxu0 0.0
    %595 = vmatpush1.msra.mxu0 0.0
    %596 = vmatprep.subr.mxu0 0.0
    %597 = vmatpush1.msra.mxu0 0.0
    %598 = vmatprep.mubr.f32.mxu0 0.0
    %599 = vmatmul.mubr.f32.gmra.mrb[0].mxu0 %v511
    %v600 = vpop.f32.mrb[0].mxu0
    %v601 = vadd.f32 %v533, %v600
    %v602 = vpop.f32.mrb[0].mxu0
    %603 = vdwg.mxu0
    %604 = vadd.xlane.f32.xlu0 %v601
    %v605 = vpop.xlane.xlu0 %604
    %v606 = vsub.f32 %v605, %v601
    %v607 = vmul.f32 %v606, 0.16666667
    %609 = vset.pattern.permute.xlu0 6
    %610 = vperm.xlu0 %609, %v601
    %v611 = vpop.permute.xlu0 %610
    %v613 = vadd.f32 %v601, %v611
    %615 = vset.pattern.permute.xlu0 6
    %616 = vperm.xlu0 %615, %v607
    %v617 = vpop.permute.xlu0 %616
    %v619 = vsub.f32 %v613, %v617
    %v620 = vld [vmem:[#allocation8 + $0xb] sm:$0x1]
    %v621 = vlaneseq
    %v622 = vshrl.u32 %v621, 7
    %v623 = vsub.s32 0, %v622
    %v624 = vrot.slane %v620, %v623
    %v625 = vmul.f32 %v619, %v624
    %626 = vst [vmem:[#allocation10] sm:$0xff] %v625
    // Predicated region
    $region34: #{tpu_custom_call.1} parent=1 // pred_check
      _
    $region35: #{tpu_custom_call.1} parent=1 // pred_check_branch
      %628 = sbr.rel (0) target = $region37
    $region36: #{tpu_custom_call.1} parent=1 // pred_region
      %s630 = ssub.s32 128, 128
      %631 = vsyncadd [#allocation4], %s630
      %s633 = sshll.u32 [#allocation10], 4
      %s634 = int_to_ptr.vmem [resolvable:$true] %s633
      %636 = dma.vmem_to_hbm [thread:$0]  %s634, 128, %s4, [#allocation4]
    $region37: #{tpu_custom_call.1} parent=1 // pred_fallthru
      _
    // Predicated region
    $region38: #{tpu_custom_call.1} parent=1 // pred_check
      _
    $region39: #{tpu_custom_call.1} parent=1 // pred_check_branch
      %638 = sbr.rel (0) target = $region41
    $region40: #{tpu_custom_call.1} parent=1 // pred_region
      %639 = dma.done [#allocation4], 128
    $region41: #{tpu_custom_call.1} parent=1 // pred_fallthru
      _
    %640 = vsyncpa [#allocation3], 1
    %641 = vsyncpa [#allocation6], 1
    %642 = vsyncpa [#allocation9], 1
    %643 = vsyncpa [#allocation4], 1

</llo_original>
